<compile_context>
chip_gen: v5e
topology: v5e:2x2
jax: 0.10.0
libtpu: 0.0.40
codegen_flags: <defaults>
</compile_context>

<pallas_src>
import functools

import jax
import jax.numpy as jnp
from jax.experimental import pallas as pl
from jax.experimental.pallas import tpu as pltpu


def _round_up(x, m):
    return ((x + m - 1) // m) * m


def _has_bf16_vpu():
    """bf16 VALUs exist on v6e/v7x; v5e and earlier lack them."""
    try:
        kind = jax.devices()[0].device_kind.lower().replace(" ", "")
    except Exception:
        return False
    return any(t in kind for t in ("v6", "v7", "tpu6", "tpu7"))


def dnn_mlp_kernel(x_ref,
                   w1_ref, b1_ref,
                   w2_ref, b2_ref,
                   w3_ref, b3_ref,
                   w4_ref, b4_ref,
                   o_ref):
    """One batch tile of the 4-layer MLP.

    x_ref : (TILE_B, input_dim) f32, batch-major straight from HBM
    wK_ref: (out_k, in_k)       torch-layout weights (bf16 fast / f32 exact)
    bK_ref: (out_k, 1)          biases (bf16 on v6e/v7x, f32 on v5e)
    w4_ref: (32, 1) f32, b4_ref: (1, 1) f32
    o_ref : (1, TILE_B)         lane-dense output row
    """
    cdt = w1_ref.dtype  # MXU operand dtype
    adt = b1_ref.dtype  # activation / bias dtype

    # Layer 1: contract in_dim of W1 (128, in) with in_dim of x (tb, in)
    # -> (128, tb).  Feature-major from here on (batch on the 128-lane axis).
    h = jax.lax.dot_general(
        w1_ref[...], x_ref[...].astype(cdt),
        dimension_numbers=(((1,), (1,)), ((), ())),
        preferred_element_type=jnp.float32)
    h = jnp.maximum(h.astype(adt) + b1_ref[...], 0.0)            # (128, tb)

    h = jnp.dot(w2_ref[...], h.astype(cdt), preferred_element_type=jnp.float32)
    h = jnp.maximum(h.astype(adt) + b2_ref[...], 0.0)            # (64, tb)

    h = jnp.dot(w3_ref[...], h.astype(cdt), preferred_element_type=jnp.float32)
    h = jnp.maximum(h.astype(adt) + b3_ref[...], 0.0)            # (32, tb)

    # fc4: single output feature -> f32 VPU multiply + cross-sublane sum.
    # Avoids an M=1 MXU pass and keeps the result lane-dense.
    y = jnp.sum(h.astype(jnp.float32) * w4_ref[...], axis=0, keepdims=True)
    o_ref[...] = (y + b4_ref[...]).astype(o_ref.dtype)           # (1, tb)


@functools.partial(jax.jit, static_argnames=("tile_b", "use_bf16", "bf16_act"))
def dnn_forward(x, params, *, tile_b=2048, use_bf16=True, bf16_act=None):
    """x: (B, input_dim) f32. params: torch-layout weights wK (out,in), bK (out,)."""
    B, in_dim = x.shape

    if bf16_act is None:
        bf16_act = _has_bf16_vpu()

    cdt = jnp.bfloat16 if use_bf16 else jnp.float32                # MXU operands
    adt = jnp.bfloat16 if (use_bf16 and bf16_act) else jnp.float32  # activations

    # Pad the batch only to a multiple of 128 (lane-dense output rows); the
    # grid uses cdiv so the last block may be partial (Pallas masks it).
    B_pad = _round_up(B, 128)
    tb = max(128, _round_up(min(tile_b, B_pad), 128))
    # Keep >= 2 grid steps when there is enough work so ("parallel",) can
    # shard batch tiles across the two TensorCores on v7x.
    if B_pad >= 2 * 128 and pl.cdiv(B_pad, tb) < 2:
        tb = max(128, _round_up(pl.cdiv(B_pad, 2), 128))
    grid = (pl.cdiv(B_pad, tb),)

    w1 = params["w1"].astype(cdt)                          # (128, in_dim)
    w2 = params["w2"].astype(cdt)                          # (64, 128)
    w3 = params["w3"].astype(cdt)                          # (32, 64)
    w4 = params["w4"].reshape(-1, 1).astype(jnp.float32)   # (32, 1)  f32 (VPU)
    b1 = params["b1"].reshape(-1, 1).astype(adt)           # (128, 1)
    b2 = params["b2"].reshape(-1, 1).astype(adt)           # (64, 1)
    b3 = params["b3"].reshape(-1, 1).astype(adt)           # (32, 1)
    b4 = params["b4"].reshape(-1, 1).astype(jnp.float32)   # (1, 1)

    # x stays batch-major f32: no wrapper-side transpose/cast HBM pass.
    x_pad = x if B_pad == B else jnp.pad(x, ((0, B_pad - B), (0, 0)))

    def resident(a):  # constant block index -> fetched once, VMEM-resident
        return pl.BlockSpec(a.shape, lambda i: (0, 0))

    flops = 2 * B_pad * (in_dim * 128 + 128 * 64 + 64 * 32 + 32)
    bytes_accessed = (B_pad * in_dim * 4 + B_pad * 4
                      + sum(int(a.size) * a.dtype.itemsize
                            for a in (w1, b1, w2, b2, w3, b3, w4, b4)))
    cost = pl.CostEstimate(flops=int(flops), transcendentals=0,
                           bytes_accessed=int(bytes_accessed))

    out = pl.pallas_call(
        dnn_mlp_kernel,
        out_shape=jax.ShapeDtypeStruct((1, B_pad), jnp.float32),
        grid=grid,
        in_specs=[pl.BlockSpec((tb, in_dim), lambda i: (i, 0)),
                  resident(w1), resident(b1),
                  resident(w2), resident(b2),
                  resident(w3), resident(b3),
                  resident(w4), resident(b4)],
        out_specs=pl.BlockSpec((1, tb), lambda i: (0, i)),
        compiler_params=pltpu.CompilerParams(
            dimension_semantics=("parallel",),
            vmem_limit_bytes=32 * 1024 * 1024),
        cost_estimate=cost,
    )(x_pad, w1, b1, w2, b2, w3, b3, w4, b4)

    return out.reshape(B_pad)[:B].reshape(B, 1)


def init_params(key, input_dim):
    """nn.Linear-style init, torch layout: wK (out, in), bK (out,)."""
    dims = [(input_dim, 128), (128, 64), (64, 32), (32, 1)]
    params = {}
    keys = jax.random.split(key, 2 * len(dims))
    for i, (fan_in, fan_out) in enumerate(dims):
        bound = float(1.0 / (fan_in ** 0.5))
        params[f"w{i + 1}"] = jax.random.uniform(
            keys[2 * i], (fan_out, fan_in), minval=-bound, maxval=bound,
            dtype=jnp.float32)
        params[f"b{i + 1}"] = jax.random.uniform(
            keys[2 * i + 1], (fan_out,), minval=-bound, maxval=bound,
            dtype=jnp.float32)
    return params


def reference_forward(x, params, compute_dtype=jnp.float32,
                      act_dtype=jnp.float32):
    """Pure-JAX reference of the PyTorch forward (y = x @ W.T + b) with
    matched MXU-operand / activation dtypes."""
    def lin(h, w, b):
        y = jnp.dot(h.astype(compute_dtype), w.T.astype(compute_dtype),
                    preferred_element_type=jnp.float32)
        return y.astype(act_dtype) + b.astype(act_dtype)

    h = jnp.maximum(lin(x, params["w1"], params["b1"]), 0.0)
    h = jnp.maximum(lin(h, params["w2"], params["b2"]), 0.0)
    h = jnp.maximum(lin(h, params["w3"], params["b3"]), 0.0)
    # fc4 in f32 (matches the kernel's f32 VPU reduction).
    return (jnp.sum(h.astype(jnp.float32) * params["w4"].reshape(1, -1),
                    axis=-1, keepdims=True) + params["b4"])


if __name__ == "__main__":
    key = jax.random.PRNGKey(0)
    k_params, k_x = jax.random.split(key)

    batch, input_dim = 8, 32
    params = init_params(k_params, input_dim)
    x = jax.random.normal(k_x, (batch, input_dim), dtype=jnp.float32)

    # Exact f32 path: must track the PyTorch-equivalent reference tightly.
    out_f32 = jax.block_until_ready(dnn_forward(x, params, use_bf16=False))
    ref_f32 = reference_forward(x, params)
    assert out_f32.shape == (batch, 1), out_f32.shape
    assert jnp.allclose(out_f32, ref_f32, atol=1e-4, rtol=1e-4), (
        f"f32 max abs err {jnp.max(jnp.abs(out_f32 - ref_f32))}")

    # Default fast path: bf16 MXU operands; bf16 activations on v6e/v7x only.
    bf16_act = _has_bf16_vpu()
    out_fast = jax.block_until_ready(dnn_forward(x, params))
    ref_fast = reference_forward(
        x, params, jnp.bfloat16,
        jnp.bfloat16 if bf16_act else jnp.float32)
    assert jnp.allclose(out_fast, ref_fast, atol=1e-2, rtol=1e-2), (
        f"fast-path max abs err {jnp.max(jnp.abs(out_fast - ref_fast))}")
    assert jnp.allclose(out_fast, ref_f32, atol=5e-2, rtol=5e-2), (
        f"fast-vs-f32 max abs err {jnp.max(jnp.abs(out_fast - ref_f32))}")

    # Larger batch exercising a multi-step grid with a partial last block
    # (B_pad=640, tb=512 -> grid=(2,), second block masked).
    B2 = 640
    x2 = jax.random.normal(jax.random.PRNGKey(1), (B2, input_dim),
                           dtype=jnp.float32)
    out2 = jax.block_until_ready(
        dnn_forward(x2, params, tile_b=512, use_bf16=False))
    ref2 = reference_forward(x2, params)
    assert out2.shape == (B2, 1), out2.shape
    assert jnp.allclose(out2, ref2, atol=1e-4, rtol=1e-4), (
        f"multi-tile max abs err {jnp.max(jnp.abs(out2 - ref2))}")

    print("KERNEL_OK")
</pallas_src>

<mosaic_0001>
module attributes {stable_mosaic.version = 11 : i64} {
  func.func @dnn_mlp_kernel(%arg0: i32, %arg1: memref<128x32xf32, #tpu.memory_space<vmem>>, %arg2: memref<128x32xf32, #tpu.memory_space<vmem>>, %arg3: memref<128x1xf32, #tpu.memory_space<vmem>>, %arg4: memref<64x128xf32, #tpu.memory_space<vmem>>, %arg5: memref<64x1xf32, #tpu.memory_space<vmem>>, %arg6: memref<32x64xf32, #tpu.memory_space<vmem>>, %arg7: memref<32x1xf32, #tpu.memory_space<vmem>>, %arg8: memref<32x1xf32, #tpu.memory_space<vmem>>, %arg9: memref<1x1xf32, #tpu.memory_space<vmem>>, %arg10: memref<1x128xf32, #tpu.memory_space<vmem>>) attributes {dimension_semantics = [#tpu.dimension_semantics<parallel>], iteration_bounds = array<i64: 1>, scalar_prefetch = 0 : i64, scratch_operands = 0 : i64, tpu.core_type = #tpu.core_type<tc>, window_params = [{transform_indices = @transform_0, window_bounds = array<i64: 128, 32>}, {pipeline_mode = #tpu.pipeline_mode<synchronous>, transform_indices = @transform_1, window_bounds = array<i64: 128, 32>}, {pipeline_mode = #tpu.pipeline_mode<synchronous>, transform_indices = @transform_2, window_bounds = array<i64: 128, 1>}, {pipeline_mode = #tpu.pipeline_mode<synchronous>, transform_indices = @transform_3, window_bounds = array<i64: 64, 128>}, {pipeline_mode = #tpu.pipeline_mode<synchronous>, transform_indices = @transform_4, window_bounds = array<i64: 64, 1>}, {pipeline_mode = #tpu.pipeline_mode<synchronous>, transform_indices = @transform_5, window_bounds = array<i64: 32, 64>}, {pipeline_mode = #tpu.pipeline_mode<synchronous>, transform_indices = @transform_6, window_bounds = array<i64: 32, 1>}, {pipeline_mode = #tpu.pipeline_mode<synchronous>, transform_indices = @transform_7, window_bounds = array<i64: 32, 1>}, {pipeline_mode = #tpu.pipeline_mode<synchronous>, transform_indices = @transform_8, window_bounds = array<i64: 1, 1>}, {transform_indices = @transform_9, window_bounds = array<i64: 1, 128>}]} {
    %c0 = arith.constant 0 : index
    %c0_0 = arith.constant 0 : index
    %0 = vector.load %arg2[%c0, %c0_0] : memref<128x32xf32, #tpu.memory_space<vmem>>, vector<128x32xf32>
    %c0_1 = arith.constant 0 : index
    %c0_2 = arith.constant 0 : index
    %1 = vector.load %arg1[%c0_1, %c0_2] : memref<128x32xf32, #tpu.memory_space<vmem>>, vector<128x32xf32>
    %cst = arith.constant dense<0.000000e+00> : vector<128x128xf32>
    %2 = tpu.matmul %0, %1, %cst {dimension_numbers = #tpu.dot_dimension_numbers<[1], [1], [0], [0], [0, 0, 1, 0], [], []>} : vector<128x32xf32>, vector<128x32xf32>, vector<128x128xf32> -> vector<128x128xf32>
    %c0_3 = arith.constant 0 : index
    %c0_4 = arith.constant 0 : index
    %3 = vector.load %arg3[%c0_3, %c0_4] : memref<128x1xf32, #tpu.memory_space<vmem>>, vector<128x1xf32>
    %4 = vector.broadcast %3 : vector<128x1xf32> to vector<128x128xf32>
    %5 = arith.addf %2, %4 : vector<128x128xf32>
    %cst_5 = arith.constant 0.000000e+00 : f32
    %6 = vector.broadcast %cst_5 : f32 to vector<128x128xf32>
    %7 = arith.maximumf %5, %6 : vector<128x128xf32>
    %c0_6 = arith.constant 0 : index
    %c0_7 = arith.constant 0 : index
    %8 = vector.load %arg4[%c0_6, %c0_7] : memref<64x128xf32, #tpu.memory_space<vmem>>, vector<64x128xf32>
    %cst_8 = arith.constant dense<0.000000e+00> : vector<64x128xf32>
    %9 = tpu.matmul %8, %7, %cst_8 {dimension_numbers = #tpu.dot_dimension_numbers<[1], [0], [0], [1], [0, 0, 1, 1], [], []>} : vector<64x128xf32>, vector<128x128xf32>, vector<64x128xf32> -> vector<64x128xf32>
    %c0_9 = arith.constant 0 : index
    %c0_10 = arith.constant 0 : index
    %10 = vector.load %arg5[%c0_9, %c0_10] : memref<64x1xf32, #tpu.memory_space<vmem>>, vector<64x1xf32>
    %11 = vector.broadcast %10 : vector<64x1xf32> to vector<64x128xf32>
    %12 = arith.addf %9, %11 : vector<64x128xf32>
    %cst_11 = arith.constant 0.000000e+00 : f32
    %13 = vector.broadcast %cst_11 : f32 to vector<64x128xf32>
    %14 = arith.maximumf %12, %13 : vector<64x128xf32>
    %c0_12 = arith.constant 0 : index
    %c0_13 = arith.constant 0 : index
    %15 = vector.load %arg6[%c0_12, %c0_13] : memref<32x64xf32, #tpu.memory_space<vmem>>, vector<32x64xf32>
    %cst_14 = arith.constant dense<0.000000e+00> : vector<32x128xf32>
    %16 = tpu.matmul %15, %14, %cst_14 {dimension_numbers = #tpu.dot_dimension_numbers<[1], [0], [0], [1], [0, 0, 1, 1], [], []>} : vector<32x64xf32>, vector<64x128xf32>, vector<32x128xf32> -> vector<32x128xf32>
    %c0_15 = arith.constant 0 : index
    %c0_16 = arith.constant 0 : index
    %17 = vector.load %arg7[%c0_15, %c0_16] : memref<32x1xf32, #tpu.memory_space<vmem>>, vector<32x1xf32>
    %18 = vector.broadcast %17 : vector<32x1xf32> to vector<32x128xf32>
    %19 = arith.addf %16, %18 : vector<32x128xf32>
    %cst_17 = arith.constant 0.000000e+00 : f32
    %20 = vector.broadcast %cst_17 : f32 to vector<32x128xf32>
    %21 = arith.maximumf %19, %20 : vector<32x128xf32>
    %c0_18 = arith.constant 0 : index
    %c0_19 = arith.constant 0 : index
    %22 = vector.load %arg8[%c0_18, %c0_19] : memref<32x1xf32, #tpu.memory_space<vmem>>, vector<32x1xf32>
    %23 = vector.broadcast %22 : vector<32x1xf32> to vector<32x128xf32>
    %24 = arith.mulf %21, %23 : vector<32x128xf32>
    %cst_20 = arith.constant dense<0.000000e+00> : vector<128xf32>
    %25 = vector.multi_reduction <add>, %24, %cst_20 [0] : vector<32x128xf32> to vector<128xf32>
    %26 = vector.shape_cast %25 : vector<128xf32> to vector<1x128xf32>
    %c0_21 = arith.constant 0 : index
    %c0_22 = arith.constant 0 : index
    %27 = vector.load %arg9[%c0_21, %c0_22] : memref<1x1xf32, #tpu.memory_space<vmem>>, vector<1x1xf32>
    %28 = vector.broadcast %27 : vector<1x1xf32> to vector<1x128xf32>
    %29 = arith.addf %26, %28 : vector<1x128xf32>
    %c0_23 = arith.constant 0 : index
    %c0_24 = arith.constant 0 : index
    %30 = vector.load %arg10[%c0_23, %c0_24] : memref<1x128xf32, #tpu.memory_space<vmem>>, vector<1x128xf32>
    tpu.vector_store %arg10[%c0_23, %c0_24], %29 {strides = array<i32>} : memref<1x128xf32, #tpu.memory_space<vmem>>, vector<1x128xf32>,
    return
  }
  func.func @transform_0(%arg0: i32) -> (i32, i32) {
    %c0_i32 = arith.constant 0 : i32
    %c0_i32_0 = arith.constant 0 : i32
    return %arg0, %c0_i32 : i32, i32
  }
  func.func @transform_1(%arg0: i32) -> (i32, i32) {
    %c0_i32 = arith.constant 0 : i32
    %c0_i32_0 = arith.constant 0 : i32
    %c0_i32_1 = arith.constant 0 : i32
    return %c0_i32, %c0_i32_0 : i32, i32
  }
  func.func @transform_2(%arg0: i32) -> (i32, i32) {
    %c0_i32 = arith.constant 0 : i32
    %c0_i32_0 = arith.constant 0 : i32
    %c0_i32_1 = arith.constant 0 : i32
    return %c0_i32, %c0_i32_0 : i32, i32
  }
  func.func @transform_3(%arg0: i32) -> (i32, i32) {
    %c0_i32 = arith.constant 0 : i32
    %c0_i32_0 = arith.constant 0 : i32
    %c0_i32_1 = arith.constant 0 : i32
    return %c0_i32, %c0_i32_0 : i32, i32
  }
  func.func @transform_4(%arg0: i32) -> (i32, i32) {
    %c0_i32 = arith.constant 0 : i32
    %c0_i32_0 = arith.constant 0 : i32
    %c0_i32_1 = arith.constant 0 : i32
    return %c0_i32, %c0_i32_0 : i32, i32
  }
  func.func @transform_5(%arg0: i32) -> (i32, i32) {
    %c0_i32 = arith.constant 0 : i32
    %c0_i32_0 = arith.constant 0 : i32
    %c0_i32_1 = arith.constant 0 : i32
    return %c0_i32, %c0_i32_0 : i32, i32
  }
  func.func @transform_6(%arg0: i32) -> (i32, i32) {
    %c0_i32 = arith.constant 0 : i32
    %c0_i32_0 = arith.constant 0 : i32
    %c0_i32_1 = arith.constant 0 : i32
    return %c0_i32, %c0_i32_0 : i32, i32
  }
  func.func @transform_7(%arg0: i32) -> (i32, i32) {
    %c0_i32 = arith.constant 0 : i32
    %c0_i32_0 = arith.constant 0 : i32
    %c0_i32_1 = arith.constant 0 : i32
    return %c0_i32, %c0_i32_0 : i32, i32
  }
  func.func @transform_8(%arg0: i32) -> (i32, i32) {
    %c0_i32 = arith.constant 0 : i32
    %c0_i32_0 = arith.constant 0 : i32
    %c0_i32_1 = arith.constant 0 : i32
    return %c0_i32, %c0_i32_0 : i32, i32
  }
  func.func @transform_9(%arg0: i32) -> (i32, i32) {
    %c0_i32 = arith.constant 0 : i32
    %c0_i32_0 = arith.constant 0 : i32
    return %c0_i32, %arg0 : i32, i32
  }
}

</mosaic_0001>

<llo_original>
// kernel: dnn_forward.1
$region0: #{dnn_forward.1}
  #allocation0 [shape = 'u32[]', space=smem, size = 0x4, offset = 0x4, fixed_abs, tag = 'smem constant byte address 0x4 - core index']
  #allocation1 [shape = 'u32[72,128]{1,0:T(1,128)}', space=vmem, size = 0x9000, scoped, tag = 'internal scratch']
  #allocation2 [shape = 'f32[1,1]{1,0:T(1,128)S(1)}', space=vmem, size = 0x200, scoped, tag = 'scoped memory for dnn_forward.1']
  %s0 = inlined_call_operand.vmem [shape: f32[128,32], index: 0, kind: input, shape index: {}]
  %s1 = inlined_call_operand.vmem [shape: f32[128,32], index: 1, kind: input, shape index: {}]
  %s2 = inlined_call_operand.vmem [shape: f32[128,1], index: 2, kind: input, shape index: {}]
  %s3 = inlined_call_operand.vmem [shape: f32[64,128], index: 3, kind: input, shape index: {}]
  %s4 = inlined_call_operand.vmem [shape: f32[64,1], index: 4, kind: input, shape index: {}]
  %s5 = inlined_call_operand.vmem [shape: f32[32,64], index: 5, kind: input, shape index: {}]
  %s6 = inlined_call_operand.vmem [shape: f32[32,1], index: 6, kind: input, shape index: {}]
  %s7 = inlined_call_operand.vmem [shape: f32[32,1], index: 7, kind: input, shape index: {}]
  %s8 = inlined_call_operand.<no memory space> [shape: f32[1,1], index: 8, kind: input, shape index: {}]
  %s9 = inlined_call_operand.vmem [shape: f32[1,128], index: 9, kind: output, shape index: {}]
  %s10 = sld [smem:[#allocation0]]
  $region46: #{dnn_forward.1} parent=0
    _
  %s12 = ssub.s32 1, %s10
  %s13 = scalar_select 0, %s12, %s10
  %v14 = vstv %s8
  %15 = vst [vmem:[#allocation2] sm:$0x1] %v14
  // Predicated region
  $region2: #{dnn_forward.1} parent=0 // pred_check
    _
  $region3: #{dnn_forward.1} parent=0 // pred_check_branch
    %17 = sbr.rel (0) target = $region5
  $region4: #{dnn_forward.1} parent=0 // pred_region
    _
  $region5: #{dnn_forward.1} parent=0 // pred_fallthru
    _
  // Predicated region
  $region6: #{dnn_forward.1} parent=0 // pred_check
    _
  $region7: #{dnn_forward.1} parent=0 // pred_check_branch
    %19 = sbr.rel (0) target = $region9
  $region8: #{dnn_forward.1} parent=0 // pred_region
    _
  $region9: #{dnn_forward.1} parent=0 // pred_fallthru
    _
  // Predicated region
  $region10: #{dnn_forward.1} parent=0 // pred_check
    _
  $region11: #{dnn_forward.1} parent=0 // pred_check_branch
    %21 = sbr.rel (0) target = $region13
  $region12: #{dnn_forward.1} parent=0 // pred_region
    _
  $region13: #{dnn_forward.1} parent=0 // pred_fallthru
    _
  // Predicated region
  $region14: #{dnn_forward.1} parent=0 // pred_check
    _
  $region15: #{dnn_forward.1} parent=0 // pred_check_branch
    %23 = sbr.rel (0) target = $region17
  $region16: #{dnn_forward.1} parent=0 // pred_region
    _
  $region17: #{dnn_forward.1} parent=0 // pred_fallthru
    _
  // Predicated region
  $region18: #{dnn_forward.1} parent=0 // pred_check
    _
  $region19: #{dnn_forward.1} parent=0 // pred_check_branch
    %25 = sbr.rel (0) target = $region21
  $region20: #{dnn_forward.1} parent=0 // pred_region
    _
  $region21: #{dnn_forward.1} parent=0 // pred_fallthru
    _
  // Predicated region
  $region22: #{dnn_forward.1} parent=0 // pred_check
    _
  $region23: #{dnn_forward.1} parent=0 // pred_check_branch
    %27 = sbr.rel (0) target = $region25
  $region24: #{dnn_forward.1} parent=0 // pred_region
    _
  $region25: #{dnn_forward.1} parent=0 // pred_fallthru
    _
  // Predicated region
  $region26: #{dnn_forward.1} parent=0 // pred_check
    _
  $region27: #{dnn_forward.1} parent=0 // pred_check_branch
    %29 = sbr.rel (0) target = $region29
  $region28: #{dnn_forward.1} parent=0 // pred_region
    _
  $region29: #{dnn_forward.1} parent=0 // pred_fallthru
    _
  // Predicated region
  $region30: #{dnn_forward.1} parent=0 // pred_check
    _
  $region31: #{dnn_forward.1} parent=0 // pred_check_branch
    %31 = sbr.rel (0) target = $region33
  $region32: #{dnn_forward.1} parent=0 // pred_region
    _
  $region33: #{dnn_forward.1} parent=0 // pred_fallthru
    _
  // Predicated region
  $region34: #{dnn_forward.1} parent=0 // pred_check
    _
  $region35: #{dnn_forward.1} parent=0 // pred_check_branch
    %33 = sbr.rel (0) target = $region37
  $region36: #{dnn_forward.1} parent=0 // pred_region
    _
  $region37: #{dnn_forward.1} parent=0 // pred_fallthru
    _
  %v34 = vld [vmem:[%s1] sm:$0xff]
  %v35 = vld [vmem:[%s1 + $0x8] sm:$0xff]
  %v36 = vld [vmem:[%s1 + $0x10] sm:$0xff]
  %v37 = vld [vmem:[%s1 + $0x18] sm:$0xff]
  %v38 = vld [vmem:[%s1 + $0x20] sm:$0xff]
  %v39 = vld [vmem:[%s1 + $0x28] sm:$0xff]
  %v40 = vld [vmem:[%s1 + $0x30] sm:$0xff]
  %v41 = vld [vmem:[%s1 + $0x38] sm:$0xff]
  %v42 = vld [vmem:[%s1 + $0x40] sm:$0xff]
  %v43 = vld [vmem:[%s1 + $0x48] sm:$0xff]
  %v44 = vld [vmem:[%s1 + $0x50] sm:$0xff]
  %v45 = vld [vmem:[%s1 + $0x58] sm:$0xff]
  %v46 = vld [vmem:[%s1 + $0x60] sm:$0xff]
  %v47 = vld [vmem:[%s1 + $0x68] sm:$0xff]
  %v48 = vld [vmem:[%s1 + $0x70] sm:$0xff]
  %v49 = vld [vmem:[%s1 + $0x78] sm:$0xff]
  %v50 = vld [vmem:[%s0] sm:$0xff]
  %v51 = vld [vmem:[%s0 + $0x8] sm:$0xff]
  %v52 = vld [vmem:[%s0 + $0x10] sm:$0xff]
  %v53 = vld [vmem:[%s0 + $0x18] sm:$0xff]
  %v54 = vld [vmem:[%s0 + $0x20] sm:$0xff]
  %v55 = vld [vmem:[%s0 + $0x28] sm:$0xff]
  %v56 = vld [vmem:[%s0 + $0x30] sm:$0xff]
  %v57 = vld [vmem:[%s0 + $0x38] sm:$0xff]
  %v58 = vld [vmem:[%s0 + $0x40] sm:$0xff]
  %v59 = vld [vmem:[%s0 + $0x48] sm:$0xff]
  %v60 = vld [vmem:[%s0 + $0x50] sm:$0xff]
  %v61 = vld [vmem:[%s0 + $0x58] sm:$0xff]
  %v62 = vld [vmem:[%s0 + $0x60] sm:$0xff]
  %v63 = vld [vmem:[%s0 + $0x68] sm:$0xff]
  %v64 = vld [vmem:[%s0 + $0x70] sm:$0xff]
  %v65 = vld [vmem:[%s0 + $0x78] sm:$0xff]
  %v66 = vld [vmem:[%s2] sm:$0xff]
  %v67 = vld [vmem:[%s2 + $0x8] sm:$0xff]
  %v68 = vld [vmem:[%s2 + $0x10] sm:$0xff]
  %v69 = vld [vmem:[%s2 + $0x18] sm:$0xff]
  %v70 = vld [vmem:[%s2 + $0x20] sm:$0xff]
  %v71 = vld [vmem:[%s2 + $0x28] sm:$0xff]
  %v72 = vld [vmem:[%s2 + $0x30] sm:$0xff]
  %v73 = vld [vmem:[%s2 + $0x38] sm:$0xff]
  %v74 = vld [vmem:[%s2 + $0x40] sm:$0xff]
  %v75 = vld [vmem:[%s2 + $0x48] sm:$0xff]
  %v76 = vld [vmem:[%s2 + $0x50] sm:$0xff]
  %v77 = vld [vmem:[%s2 + $0x58] sm:$0xff]
  %v78 = vld [vmem:[%s2 + $0x60] sm:$0xff]
  %v79 = vld [vmem:[%s2 + $0x68] sm:$0xff]
  %v80 = vld [vmem:[%s2 + $0x70] sm:$0xff]
  %v81 = vld [vmem:[%s2 + $0x78] sm:$0xff]
  %83 = vset.pattern.permute.xlu0 0
  %84 = vperm.xlu0 %83, %v66
  %v85 = vpop.permute.xlu0 %84
  %88 = vset.pattern.permute.xlu0 0
  %89 = vperm.xlu0 %88, %v67
  %v90 = vpop.permute.xlu0 %89
  %93 = vset.pattern.permute.xlu0 0
  %94 = vperm.xlu0 %93, %v68
  %v95 = vpop.permute.xlu0 %94
  %98 = vset.pattern.permute.xlu0 0
  %99 = vperm.xlu0 %98, %v69
  %v100 = vpop.permute.xlu0 %99
  %103 = vset.pattern.permute.xlu0 0
  %104 = vperm.xlu0 %103, %v70
  %v105 = vpop.permute.xlu0 %104
  %108 = vset.pattern.permute.xlu0 0
  %109 = vperm.xlu0 %108, %v71
  %v110 = vpop.permute.xlu0 %109
  %113 = vset.pattern.permute.xlu0 0
  %114 = vperm.xlu0 %113, %v72
  %v115 = vpop.permute.xlu0 %114
  %118 = vset.pattern.permute.xlu0 0
  %119 = vperm.xlu0 %118, %v73
  %v120 = vpop.permute.xlu0 %119
  %123 = vset.pattern.permute.xlu0 0
  %124 = vperm.xlu0 %123, %v74
  %v125 = vpop.permute.xlu0 %124
  %128 = vset.pattern.permute.xlu0 0
  %129 = vperm.xlu0 %128, %v75
  %v130 = vpop.permute.xlu0 %129
  %133 = vset.pattern.permute.xlu0 0
  %134 = vperm.xlu0 %133, %v76
  %v135 = vpop.permute.xlu0 %134
  %138 = vset.pattern.permute.xlu0 0
  %139 = vperm.xlu0 %138, %v77
  %v140 = vpop.permute.xlu0 %139
  %143 = vset.pattern.permute.xlu0 0
  %144 = vperm.xlu0 %143, %v78
  %v145 = vpop.permute.xlu0 %144
  %148 = vset.pattern.permute.xlu0 0
  %149 = vperm.xlu0 %148, %v79
  %v150 = vpop.permute.xlu0 %149
  %153 = vset.pattern.permute.xlu0 0
  %154 = vperm.xlu0 %153, %v80
  %v155 = vpop.permute.xlu0 %154
  %158 = vset.pattern.permute.xlu0 0
  %159 = vperm.xlu0 %158, %v81
  %v160 = vpop.permute.xlu0 %159
  %vm162 = vcmask 261120
  %v164 = vsel %vm162, %v34, 0
  %v167 = vsel %vm162, %v35, 0
  %v170 = vsel %vm162, %v36, 0
  %v173 = vsel %vm162, %v37, 0
  %v176 = vsel %vm162, %v38, 0
  %v179 = vsel %vm162, %v39, 0
  %v182 = vsel %vm162, %v40, 0
  %v185 = vsel %vm162, %v41, 0
  %v188 = vsel %vm162, %v42, 0
  %v191 = vsel %vm162, %v43, 0
  %v194 = vsel %vm162, %v44, 0
  %v197 = vsel %vm162, %v45, 0
  %v200 = vsel %vm162, %v46, 0
  %v203 = vsel %vm162, %v47, 0
  %v206 = vsel %vm162, %v48, 0
  %v209 = vsel %vm162, %v49, 0
  %v212 = vsel %vm162, %v50, 0
  %v215 = vsel %vm162, %v51, 0
  %v218 = vsel %vm162, %v52, 0
  %v221 = vsel %vm162, %v53, 0
  %v224 = vsel %vm162, %v54, 0
  %v227 = vsel %vm162, %v55, 0
  %v230 = vsel %vm162, %v56, 0
  %v233 = vsel %vm162, %v57, 0
  %v236 = vsel %vm162, %v58, 0
  %v239 = vsel %vm162, %v59, 0
  %v242 = vsel %vm162, %v60, 0
  %v245 = vsel %vm162, %v61, 0
  %v248 = vsel %vm162, %v62, 0
  %v251 = vsel %vm162, %v63, 0
  %v254 = vsel %vm162, %v64, 0
  %v257 = vsel %vm162, %v65, 0
  %259 = vmatpush.xpose.msra.mxu0 %v257
  %260 = vmatpush.xpose.msra.mxu0 %v254
  %261 = vmatpush.xpose.msra.mxu0 %v251
  %262 = vmatpush.xpose.msra.mxu0 %v248
  %263 = vmatpush.xpose.msra.mxu0 %v245
  %264 = vmatpush.xpose.msra.mxu0 %v242
  %265 = vmatpush.xpose.msra.mxu0 %v239
  %266 = vmatpush.xpose.msra.mxu0 %v236
  %267 = vmatpush.xpose.msra.mxu0 %v233
  %268 = vmatpush.xpose.msra.mxu0 %v230
  %269 = vmatpush.xpose.msra.mxu0 %v227
  %270 = vmatpush.xpose.msra.mxu0 %v224
  %271 = vmatpush.xpose.msra.mxu0 %v221
  %272 = vmatpush.xpose.msra.mxu0 %v218
  %273 = vmatpush.xpose.msra.mxu0 %v215
  %274 = vmatpush.xpose.msra.mxu0 %v212
  %275 = vmatmul.f32.gmra.mxu0 %v164
  %v276 = vpop.f32.mrf.mxu0
  %v277 = vadd.f32 %v85, %v276
  %278 = vmatmul.f32.gmra.mxu0 %v167
  %v279 = vpop.f32.mrf.mxu0
  %v280 = vadd.f32 %v90, %v279
  %281 = vmatmul.f32.gmra.mxu0 %v170
  %v282 = vpop.f32.mrf.mxu0
  %v283 = vadd.f32 %v95, %v282
  %284 = vmatmul.f32.gmra.mxu0 %v173
  %v285 = vpop.f32.mrf.mxu0
  %v286 = vadd.f32 %v100, %v285
  %287 = vmatmul.f32.gmra.mxu0 %v176
  %v288 = vpop.f32.mrf.mxu0
  %v289 = vadd.f32 %v105, %v288
  %290 = vmatmul.f32.gmra.mxu0 %v179
  %v291 = vpop.f32.mrf.mxu0
  %v292 = vadd.f32 %v110, %v291
  %293 = vmatmul.f32.gmra.mxu0 %v182
  %v294 = vpop.f32.mrf.mxu0
  %v295 = vadd.f32 %v115, %v294
  %296 = vmatmul.f32.gmra.mxu0 %v185
  %v297 = vpop.f32.mrf.mxu0
  %v298 = vadd.f32 %v120, %v297
  %299 = vmatmul.f32.gmra.mxu0 %v188
  %v300 = vpop.f32.mrf.mxu0
  %v301 = vadd.f32 %v125, %v300
  %302 = vmatmul.f32.gmra.mxu0 %v191
  %v303 = vpop.f32.mrf.mxu0
  %v304 = vadd.f32 %v130, %v303
  %305 = vmatmul.f32.gmra.mxu0 %v194
  %v306 = vpop.f32.mrf.mxu0
  %v307 = vadd.f32 %v135, %v306
  %308 = vmatmul.f32.gmra.mxu0 %v197
  %v309 = vpop.f32.mrf.mxu0
  %v310 = vadd.f32 %v140, %v309
  %311 = vmatmul.f32.gmra.mxu0 %v200
  %v312 = vpop.f32.mrf.mxu0
  %v313 = vadd.f32 %v145, %v312
  %314 = vmatmul.f32.gmra.mxu0 %v203
  %v315 = vpop.f32.mrf.mxu0
  %v316 = vadd.f32 %v150, %v315
  %317 = vmatmul.f32.gmra.mxu0 %v206
  %v318 = vpop.f32.mrf.mxu0
  %v319 = vadd.f32 %v155, %v318
  %320 = vmatmul.f32.gmra.mxu0 %v209
  %v321 = vpop.f32.mrf.mxu0
  %v322 = vadd.f32 %v160, %v321
  %323 = vdwg.mxu0
  %v324 = vmax.f32 %v277, 0.0
  %v325 = vmax.f32 %v280, 0.0
  %v326 = vmax.f32 %v283, 0.0
  %v327 = vmax.f32 %v286, 0.0
  %v328 = vmax.f32 %v289, 0.0
  %v329 = vmax.f32 %v292, 0.0
  %v330 = vmax.f32 %v295, 0.0
  %v331 = vmax.f32 %v298, 0.0
  %v332 = vmax.f32 %v301, 0.0
  %v333 = vmax.f32 %v304, 0.0
  %v334 = vmax.f32 %v307, 0.0
  %v335 = vmax.f32 %v310, 0.0
  %v336 = vmax.f32 %v313, 0.0
  %v337 = vmax.f32 %v316, 0.0
  %v338 = vmax.f32 %v319, 0.0
  %v339 = vmax.f32 %v322, 0.0
  %v340 = vld [vmem:[%s3] sm:$0xff]
  %v341 = vld [vmem:[%s3 + $0x8] sm:$0xff]
  %v342 = vld [vmem:[%s3 + $0x10] sm:$0xff]
  %v343 = vld [vmem:[%s3 + $0x18] sm:$0xff]
  %v344 = vld [vmem:[%s3 + $0x20] sm:$0xff]
  %v345 = vld [vmem:[%s3 + $0x28] sm:$0xff]
  %v346 = vld [vmem:[%s3 + $0x30] sm:$0xff]
  %v347 = vld [vmem:[%s3 + $0x38] sm:$0xff]
  %v348 = vld [vmem:[%s4] sm:$0xff]
  %v349 = vld [vmem:[%s4 + $0x8] sm:$0xff]
  %v350 = vld [vmem:[%s4 + $0x10] sm:$0xff]
  %v351 = vld [vmem:[%s4 + $0x18] sm:$0xff]
  %v352 = vld [vmem:[%s4 + $0x20] sm:$0xff]
  %v353 = vld [vmem:[%s4 + $0x28] sm:$0xff]
  %v354 = vld [vmem:[%s4 + $0x30] sm:$0xff]
  %v355 = vld [vmem:[%s4 + $0x38] sm:$0xff]
  %357 = vset.pattern.permute.xlu0 0
  %358 = vperm.xlu0 %357, %v348
  %v359 = vpop.permute.xlu0 %358
  %362 = vset.pattern.permute.xlu0 0
  %363 = vperm.xlu0 %362, %v349
  %v364 = vpop.permute.xlu0 %363
  %367 = vset.pattern.permute.xlu0 0
  %368 = vperm.xlu0 %367, %v350
  %v369 = vpop.permute.xlu0 %368
  %372 = vset.pattern.permute.xlu0 0
  %373 = vperm.xlu0 %372, %v351
  %v374 = vpop.permute.xlu0 %373
  %377 = vset.pattern.permute.xlu0 0
  %378 = vperm.xlu0 %377, %v352
  %v379 = vpop.permute.xlu0 %378
  %382 = vset.pattern.permute.xlu0 0
  %383 = vperm.xlu0 %382, %v353
  %v384 = vpop.permute.xlu0 %383
  %387 = vset.pattern.permute.xlu0 0
  %388 = vperm.xlu0 %387, %v354
  %v389 = vpop.permute.xlu0 %388
  %392 = vset.pattern.permute.xlu0 0
  %393 = vperm.xlu0 %392, %v355
  %v394 = vpop.permute.xlu0 %393
  %396 = vmatpush.msra.mxu0 %v339
  %397 = vmatpush.msra.mxu0 %v338
  %398 = vmatpush.msra.mxu0 %v337
  %399 = vmatpush.msra.mxu0 %v336
  %400 = vmatpush.msra.mxu0 %v335
  %401 = vmatpush.msra.mxu0 %v334
  %402 = vmatpush.msra.mxu0 %v333
  %403 = vmatpush.msra.mxu0 %v332
  %404 = vmatpush.msra.mxu0 %v331
  %405 = vmatpush.msra.mxu0 %v330
  %406 = vmatpush.msra.mxu0 %v329
  %407 = vmatpush.msra.mxu0 %v328
  %408 = vmatpush.msra.mxu0 %v327
  %409 = vmatpush.msra.mxu0 %v326
  %410 = vmatpush.msra.mxu0 %v325
  %411 = vmatpush.msra.mxu0 %v324
  %412 = vmatmul.f32.gmra.mxu0 %v340
  %v413 = vpop.f32.mrf.mxu0
  %v414 = vadd.f32 %v359, %v413
  %415 = vmatmul.f32.gmra.mxu0 %v341
  %v416 = vpop.f32.mrf.mxu0
  %v417 = vadd.f32 %v364, %v416
  %418 = vmatmul.f32.gmra.mxu0 %v342
  %v419 = vpop.f32.mrf.mxu0
  %v420 = vadd.f32 %v369, %v419
  %421 = vmatmul.f32.gmra.mxu0 %v343
  %v422 = vpop.f32.mrf.mxu0
  %v423 = vadd.f32 %v374, %v422
  %424 = vmatmul.f32.gmra.mxu0 %v344
  %v425 = vpop.f32.mrf.mxu0
  %v426 = vadd.f32 %v379, %v425
  %427 = vmatmul.f32.gmra.mxu0 %v345
  %v428 = vpop.f32.mrf.mxu0
  %v429 = vadd.f32 %v384, %v428
  %430 = vmatmul.f32.gmra.mxu0 %v346
  %v431 = vpop.f32.mrf.mxu0
  %v432 = vadd.f32 %v389, %v431
  %433 = vmatmul.f32.gmra.mxu0 %v347
  %v434 = vpop.f32.mrf.mxu0
  %v435 = vadd.f32 %v394, %v434
  %436 = vdwg.mxu0
  %v437 = vmax.f32 %v414, 0.0
  %v438 = vmax.f32 %v417, 0.0
  %v439 = vmax.f32 %v420, 0.0
  %v440 = vmax.f32 %v423, 0.0
  %v441 = vmax.f32 %v426, 0.0
  %v442 = vmax.f32 %v429, 0.0
  %v443 = vmax.f32 %v432, 0.0
  %v444 = vmax.f32 %v435, 0.0
  %v445 = vld [vmem:[%s5] sm:$0xff]
  %v446 = vld [vmem:[%s5 + $0x8] sm:$0xff]
  %v447 = vld [vmem:[%s5 + $0x10] sm:$0xff]
  %v448 = vld [vmem:[%s5 + $0x18] sm:$0xff]
  %v449 = vld [vmem:[%s6] sm:$0xff]
  %v450 = vld [vmem:[%s6 + $0x8] sm:$0xff]
  %v451 = vld [vmem:[%s6 + $0x10] sm:$0xff]
  %v452 = vld [vmem:[%s6 + $0x18] sm:$0xff]
  %454 = vset.pattern.permute.xlu0 0
  %455 = vperm.xlu0 %454, %v449
  %v456 = vpop.permute.xlu0 %455
  %459 = vset.pattern.permute.xlu0 0
  %460 = vperm.xlu0 %459, %v450
  %v461 = vpop.permute.xlu0 %460
  %464 = vset.pattern.permute.xlu0 0
  %465 = vperm.xlu0 %464, %v451
  %v466 = vpop.permute.xlu0 %465
  %469 = vset.pattern.permute.xlu0 0
  %470 = vperm.xlu0 %469, %v452
  %v471 = vpop.permute.xlu0 %470
  %vm473 = vcmask 523264
  %v475 = vsel %vm473, %v445, 0
  %v478 = vsel %vm473, %v446, 0
  %v481 = vsel %vm473, %v447, 0
  %v484 = vsel %vm473, %v448, 0
  %486 = vmatpush.msra.mxu0 0.0
  %487 = vmatpush.msra.mxu0 0.0
  %488 = vmatpush.msra.mxu0 0.0
  %489 = vmatpush.msra.mxu0 0.0
  %490 = vmatpush.msra.mxu0 0.0
  %491 = vmatpush.msra.mxu0 0.0
  %492 = vmatpush.msra.mxu0 0.0
  %493 = vmatpush.msra.mxu0 0.0
  %494 = vmatpush.msra.mxu0 %v444
  %495 = vmatpush.msra.mxu0 %v443
  %496 = vmatpush.msra.mxu0 %v442
  %497 = vmatpush.msra.mxu0 %v441
  %498 = vmatpush.msra.mxu0 %v440
  %499 = vmatpush.msra.mxu0 %v439
  %500 = vmatpush.msra.mxu0 %v438
  %501 = vmatpush.msra.mxu0 %v437
  %502 = vmatmul.f32.gmra.mxu0 %v475
  %v503 = vpop.f32.mrf.mxu0
  %v504 = vadd.f32 %v456, %v503
  %505 = vmatmul.f32.gmra.mxu0 %v478
  %v506 = vpop.f32.mrf.mxu0
  %v507 = vadd.f32 %v461, %v506
  %508 = vmatmul.f32.gmra.mxu0 %v481
  %v509 = vpop.f32.mrf.mxu0
  %v510 = vadd.f32 %v466, %v509
  %511 = vmatmul.f32.gmra.mxu0 %v484
  %v512 = vpop.f32.mrf.mxu0
  %v513 = vadd.f32 %v471, %v512
  %514 = vdwg.mxu0
  %v515 = vmax.f32 %v504, 0.0
  %v516 = vmax.f32 %v507, 0.0
  %v517 = vmax.f32 %v510, 0.0
  %v518 = vmax.f32 %v513, 0.0
  %v519 = vld [vmem:[%s7] sm:$0xff]
  %v520 = vld [vmem:[%s7 + $0x8] sm:$0xff]
  %v521 = vld [vmem:[%s7 + $0x10] sm:$0xff]
  %v522 = vld [vmem:[%s7 + $0x18] sm:$0xff]
  %524 = vset.pattern.permute.xlu0 0
  %525 = vperm.xlu0 %524, %v519
  %v526 = vpop.permute.xlu0 %525
  %529 = vset.pattern.permute.xlu0 0
  %530 = vperm.xlu0 %529, %v520
  %v531 = vpop.permute.xlu0 %530
  %534 = vset.pattern.permute.xlu0 0
  %535 = vperm.xlu0 %534, %v521
  %v536 = vpop.permute.xlu0 %535
  %539 = vset.pattern.permute.xlu0 0
  %540 = vperm.xlu0 %539, %v522
  %v541 = vpop.permute.xlu0 %540
  %v543 = vmul.f32 %v515, %v526
  %v544 = vmul.f32 %v516, %v531
  %v545 = vmul.f32 %v517, %v536
  %v546 = vmul.f32 %v518, %v541
  %v547 = vadd.f32 %v543, %v544
  %v548 = vadd.f32 %v547, %v545
  %v549 = vadd.f32 %v548, %v546
  %v550 = vrot.slane %v549, 4
  %v551 = vadd.f32 %v549, %v550
  %v552 = vrot.slane %v551, 2
  %v553 = vadd.f32 %v551, %v552
  %v554 = vrot.slane %v553, 1
  %v555 = vadd.f32 %v553, %v554
  %v556 = vld [vmem:[#allocation2] sm:$0x1]
  %558 = vset.pattern.permute.xlu0 0
  %559 = vperm.xlu0 %558, %v556
  %v560 = vpop.permute.xlu0 %559
  %v562 = vperm.slane %v560, 0
  %v563 = vadd.f32 %v555, %v562
  %564 = vst [vmem:[%s9] sm:$0x1] %v563
  // Predicated region
  $region38: #{dnn_forward.1} parent=0 // pred_check
    _
  $region39: #{dnn_forward.1} parent=0 // pred_check_branch
    %566 = sbr.rel (0) target = $region41
  $region40: #{dnn_forward.1} parent=0 // pred_region
    _
  $region41: #{dnn_forward.1} parent=0 // pred_fallthru
    _
  // Predicated region
  $region42: #{dnn_forward.1} parent=0 // pred_check
    _
  $region43: #{dnn_forward.1} parent=0 // pred_check_branch
    %568 = sbr.rel (0) target = $region45
  $region44: #{dnn_forward.1} parent=0 // pred_region
    _
  $region45: #{dnn_forward.1} parent=0 // pred_fallthru
    _

</llo_original>
